<compile_context>
chip_gen: v6e
topology: v6e:2x2x1
jax: 0.10.0
libtpu: 0.0.40
codegen_flags: <defaults>
</compile_context>

<pallas_src>
import jax
import jax.numpy as jnp
from jax import lax
from jax.experimental import pallas as pl
from jax.experimental.pallas import tpu as pltpu


def fused_kernel(idx_ref, off_ref, emb_ref, x_ref, wfb_ref, out_ref):
    """Single-invocation kernel (no grid): whole problem fits in VMEM.

    idx_ref : VMEM (L, 1)   int32  -- flattened embedding indices (column)
    off_ref : VMEM (B, 1)   int32  -- bag start offsets (monotonic, off[0]=0)
    emb_ref : VMEM (E, 3)   f32    -- shared EmbeddingBag weight
    x_ref   : VMEM (B, k)   f32    -- MLP input
    wfb_ref : VMEM (k+1, 3) f32    -- fused MLP weight (rows 0..k-1) + bias (row k)
    out_ref : VMEM (B, 12)  f32    -- [eb | eb | eb | mlp] concatenated on dim 1
    """
    L = idx_ref.shape[0]
    E = emb_ref.shape[0]
    B = out_ref.shape[0]
    k = x_ref.shape[1]

    # ---- EmbeddingBag(mode='mean') as two MXU matmuls ----------------------
    # Gather all L rows at once: one-hot(L, E) @ emb_w(E, 3).
    idx = idx_ref[...]                                            # (L, 1) i32
    onehot = (lax.broadcasted_iota(jnp.int32, (L, E), 1) == idx)  # (L, E) bool
    rows = jnp.dot(onehot.astype(jnp.float32), emb_ref[...],
                   preferred_element_type=jnp.float32)            # (L, 3)

    # Bag membership built from starts only (no offset-by-1 slice, no concat):
    #   bag(p) = (#starts <= p) - 1   (offsets monotonic, PyTorch contract)
    #   in_bag[b, p] = (bag(p) == b)
    # Empty bags get an all-zero row -> mean 0 (matches PyTorch).
    starts = off_ref[...]                                         # (B, 1) i32
    pos = lax.broadcasted_iota(jnp.int32, (B, L), 1)              # (B, L)
    ge = (pos >= starts).astype(jnp.int32)                        # (B, L)
    bag_of_pos = jnp.sum(ge, axis=0, keepdims=True) - 1           # (1, L)
    row_id = lax.broadcasted_iota(jnp.int32, (B, L), 0)           # (B, L)
    in_bag = (row_id == bag_of_pos).astype(jnp.float32)           # (B, L)

    counts = jnp.sum(in_bag, axis=1, keepdims=True)               # (B, 1)
    inv = 1.0 / jnp.maximum(counts, 1.0)  # exact recip (approx would break 1e-5)

    # Sum per bag on the MXU, normalize after (matches torch sum-then-divide).
    eb = jnp.dot(in_bag, rows, preferred_element_type=jnp.float32) * inv  # (B,3)

    # ---- Fused MLP: one MXU matmul + 1d bias -------------------------------
    w_f = wfb_ref[0:k, :]                                         # (k, 3)
    b_f = wfb_ref[k:k + 1, :]                                     # (1, 3)
    mlp = jnp.dot(x_ref[...], w_f,
                  preferred_element_type=jnp.float32) + b_f       # (B, 3)

    # ---- Assemble full (B, 12) result and store once ------------------------
    out_ref[...] = jnp.concatenate([eb, eb, eb, mlp], axis=1)


def fuse_mlp_params(w0, b0, w1, b1, w2, b2):
    """One-time fold of the 3 activation-free Linears into (k+1, 3).

    Call this ONCE when parameters are created / loaded — it is deliberately
    kept out of the per-call forward path.
    """
    w_fused = (w0.T @ w1.T) @ w2.T                     # (k, 3)
    b_fused = (b0 @ w1.T + b1) @ w2.T + b2             # (3,)
    return jnp.concatenate([w_fused, b_fused.reshape(1, 3)], axis=0)  # (k+1, 3)


def model_forward(eb_input, eb_offsets, mlp_input, emb_w, wfb):
    """Per-call wrapper: only free reshapes + one pallas_call."""
    L = eb_input.shape[0]
    B = eb_offsets.shape[0]
    E = emb_w.shape[0]
    k = mlp_input.shape[1]

    idx_2d = eb_input.astype(jnp.int32).reshape(L, 1)
    off_2d = eb_offsets.astype(jnp.int32).reshape(B, 1)

    vmem = pl.BlockSpec(memory_space=pltpu.MemorySpace.VMEM)

    flops = 2 * L * E * 3 + 2 * B * L * 3 + 2 * B * k * 3
    bytes_accessed = 4 * (L + B + E * 3 + B * k + (k + 1) * 3 + B * 12)

    return pl.pallas_call(
        fused_kernel,
        out_shape=jax.ShapeDtypeStruct((B, 12), jnp.float32),
        in_specs=[vmem, vmem, vmem, vmem, vmem],
        out_specs=vmem,
        cost_estimate=pl.CostEstimate(
            flops=flops, transcendentals=0, bytes_accessed=bytes_accessed),
    )(idx_2d, off_2d, emb_w, mlp_input, wfb)


def reference_forward(eb_input, eb_offsets, mlp_input, params):
    """Pure-JAX reference matching PyTorch semantics (3 separate Linears)."""
    emb_w, w0, b0, w1, b1, w2, b2 = params
    L = eb_input.shape[0]
    B = eb_offsets.shape[0]
    off_ext = jnp.concatenate(
        [eb_offsets.astype(jnp.int32), jnp.array([L], dtype=jnp.int32)])
    rows = emb_w[eb_input]
    bags = []
    for b in range(B):
        s = int(off_ext[b])
        e = int(off_ext[b + 1])
        if e > s:
            bags.append(rows[s:e].mean(axis=0))
        else:
            bags.append(jnp.zeros((3,), jnp.float32))
    eb = jnp.stack(bags, axis=0)
    h = mlp_input @ w0.T + b0
    h = h @ w1.T + b1
    h = h @ w2.T + b2
    return jnp.concatenate([eb, eb, eb, h], axis=1)


if __name__ == "__main__":
    num_embeddings = 32
    k = 16          # MLP input feature dim
    B = 8           # number of bags == MLP batch
    per_bag = 3
    L = B * per_bag

    key = jax.random.PRNGKey(0)
    k_emb, k_idx, k_x, k0, k1, k2, kb0, kb1, kb2 = jax.random.split(key, 9)

    # Deterministic synthetic parameters (PyTorch weight conventions).
    emb_w = jax.random.normal(k_emb, (num_embeddings, 3), jnp.float32)
    w0 = jax.random.normal(k0, (12, k), jnp.float32) * 0.1   # Linear(k, 12)
    b0 = jax.random.normal(kb0, (12,), jnp.float32) * 0.1
    w1 = jax.random.normal(k1, (6, 12), jnp.float32) * 0.1   # Linear(12, 6)
    b1 = jax.random.normal(kb1, (6,), jnp.float32) * 0.1
    w2 = jax.random.normal(k2, (3, 6), jnp.float32) * 0.1    # Linear(6, 3)
    b2 = jax.random.normal(kb2, (3,), jnp.float32) * 0.1

    # One-time parameter preparation, outside the jitted forward path.
    wfb = jax.block_until_ready(fuse_mlp_params(w0, b0, w1, b1, w2, b2))

    # Inputs (EmbeddingBag 1-D input + offsets, and MLP input).
    eb_input = jax.random.randint(k_idx, (L,), 0, num_embeddings, jnp.int32)
    eb_offsets = jnp.arange(0, L, per_bag, dtype=jnp.int32)   # (B,), offsets[0]=0
    mlp_input = jax.random.normal(k_x, (B, k), jnp.float32)

    fwd = jax.jit(model_forward)
    out = jax.block_until_ready(fwd(eb_input, eb_offsets, mlp_input, emb_w, wfb))

    ref = reference_forward(eb_input, eb_offsets, mlp_input,
                            (emb_w, w0, b0, w1, b1, w2, b2))
    assert out.shape == (B, 12), out.shape
    # Weight folding reorders fp32 accumulation; differences are at the
    # few-ulp level and comfortably within this tolerance.
    assert jnp.allclose(out, ref, atol=1e-5, rtol=1e-5), (
        f"max abs err {jnp.max(jnp.abs(out - ref))}")

    print("KERNEL_OK")
</pallas_src>

<mosaic_0001>
module attributes {stable_mosaic.version = 11 : i64} {
  func.func @fused_kernel(%arg0: memref<24x1xi32, #tpu.memory_space<vmem>>, %arg1: memref<8x1xi32, #tpu.memory_space<vmem>>, %arg2: memref<32x3xf32, #tpu.memory_space<vmem>>, %arg3: memref<8x16xf32, #tpu.memory_space<vmem>>, %arg4: memref<17x3xf32, #tpu.memory_space<vmem>>, %arg5: memref<8x12xf32, #tpu.memory_space<vmem>>) attributes {dimension_semantics = [], scalar_prefetch = 0 : i64, scratch_operands = 0 : i64, tpu.core_type = #tpu.core_type<tc>} {
    %c0 = arith.constant 0 : index
    %c0_0 = arith.constant 0 : index
    %0 = vector.load %arg0[%c0, %c0_0] : memref<24x1xi32, #tpu.memory_space<vmem>>, vector<24x1xi32>
    %1 = tpu.iota {dimensions = array<i32: 1>} : vector<24x32xi32>
    %2 = vector.broadcast %0 : vector<24x1xi32> to vector<24x32xi32>
    %3 = arith.cmpi eq, %1, %2 : vector<24x32xi32>
    %4 = arith.extui %3 : vector<24x32xi1> to vector<24x32xi32>
    %5 = arith.sitofp %4 : vector<24x32xi32> to vector<24x32xf32>
    %c0_1 = arith.constant 0 : index
    %c0_2 = arith.constant 0 : index
    %6 = vector.load %arg2[%c0_1, %c0_2] : memref<32x3xf32, #tpu.memory_space<vmem>>, vector<32x3xf32>
    %cst = arith.constant dense<0.000000e+00> : vector<24x3xf32>
    %7 = tpu.matmul %5, %6, %cst {dimension_numbers = #tpu.dot_dimension_numbers<[1], [0], [0], [1], [0, 0, 1, 1], [], []>} : vector<24x32xf32>, vector<32x3xf32>, vector<24x3xf32> -> vector<24x3xf32>
    %c0_3 = arith.constant 0 : index
    %c0_4 = arith.constant 0 : index
    %8 = vector.load %arg1[%c0_3, %c0_4] : memref<8x1xi32, #tpu.memory_space<vmem>>, vector<8x1xi32>
    %9 = tpu.iota {dimensions = array<i32: 1>} : vector<8x24xi32>
    %10 = vector.broadcast %8 : vector<8x1xi32> to vector<8x24xi32>
    %11 = arith.cmpi sge, %9, %10 : vector<8x24xi32>
    %12 = arith.extui %11 : vector<8x24xi1> to vector<8x24xi32>
    %cst_5 = arith.constant dense<0> : vector<24xi32>
    %13 = vector.multi_reduction <add>, %12, %cst_5 [0] : vector<8x24xi32> to vector<24xi32>
    %14 = vector.shape_cast %13 : vector<24xi32> to vector<1x24xi32>
    %c1_i32 = arith.constant 1 : i32
    %15 = vector.broadcast %c1_i32 : i32 to vector<1x24xi32>
    %16 = arith.subi %14, %15 : vector<1x24xi32>
    %17 = tpu.iota {dimensions = array<i32: 0>} : vector<8x24xi32>
    %18 = vector.broadcast %16 : vector<1x24xi32> to vector<8x24xi32>
    %19 = arith.cmpi eq, %17, %18 : vector<8x24xi32>
    %20 = arith.extui %19 : vector<8x24xi1> to vector<8x24xi32>
    %21 = arith.sitofp %20 : vector<8x24xi32> to vector<8x24xf32>
    %cst_6 = arith.constant dense<0.000000e+00> : vector<8xf32>
    %22 = vector.multi_reduction <add>, %21, %cst_6 [1] : vector<8x24xf32> to vector<8xf32>
    %23 = vector.shape_cast %22 : vector<8xf32> to vector<8x1xf32>
    %cst_7 = arith.constant 1.000000e+00 : f32
    %24 = vector.broadcast %cst_7 : f32 to vector<8x1xf32>
    %25 = arith.maximumf %23, %24 : vector<8x1xf32>
    %cst_8 = arith.constant 1.000000e+00 : f32
    %26 = vector.broadcast %cst_8 : f32 to vector<8x1xf32>
    %27 = arith.divf %26, %25 : vector<8x1xf32>
    %cst_9 = arith.constant dense<0.000000e+00> : vector<8x3xf32>
    %28 = tpu.matmul %21, %7, %cst_9 {dimension_numbers = #tpu.dot_dimension_numbers<[1], [0], [0], [1], [0, 0, 1, 1], [], []>} : vector<8x24xf32>, vector<24x3xf32>, vector<8x3xf32> -> vector<8x3xf32>
    %29 = vector.broadcast %27 : vector<8x1xf32> to vector<8x3xf32>
    %30 = arith.mulf %28, %29 : vector<8x3xf32>
    %c0_10 = arith.constant 0 : index
    %c0_11 = arith.constant 0 : index
    %31 = vector.load %arg4[%c0_10, %c0_11] : memref<17x3xf32, #tpu.memory_space<vmem>>, vector<16x3xf32>
    %c16 = arith.constant 16 : index
    %c0_12 = arith.constant 0 : index
    %32 = vector.load %arg4[%c16, %c0_12] : memref<17x3xf32, #tpu.memory_space<vmem>>, vector<1x3xf32>
    %c0_13 = arith.constant 0 : index
    %c0_14 = arith.constant 0 : index
    %33 = vector.load %arg3[%c0_13, %c0_14] : memref<8x16xf32, #tpu.memory_space<vmem>>, vector<8x16xf32>
    %cst_15 = arith.constant dense<0.000000e+00> : vector<8x3xf32>
    %34 = tpu.matmul %33, %31, %cst_15 {dimension_numbers = #tpu.dot_dimension_numbers<[1], [0], [0], [1], [0, 0, 1, 1], [], []>} : vector<8x16xf32>, vector<16x3xf32>, vector<8x3xf32> -> vector<8x3xf32>
    %35 = vector.broadcast %32 : vector<1x3xf32> to vector<8x3xf32>
    %36 = arith.addf %34, %35 : vector<8x3xf32>
    %37 = tpu.concatenate %30, %30, %30, %36 in 1 : vector<8x3xf32>, vector<8x3xf32>, vector<8x3xf32>, vector<8x3xf32> -> vector<8x12xf32>
    %c0_16 = arith.constant 0 : index
    %c0_17 = arith.constant 0 : index
    %38 = vector.load %arg5[%c0_16, %c0_17] : memref<8x12xf32, #tpu.memory_space<vmem>>, vector<8x12xf32>
    tpu.vector_store %arg5[%c0_16, %c0_17], %37 {strides = array<i32>} : memref<8x12xf32, #tpu.memory_space<vmem>>, vector<8x12xf32>,
    return
  }
}

</mosaic_0001>

<llo_original>
// kernel: model_forward.1
$region0: #{model_forward.1}
  #allocation0 [shape = 'u32[]', space=smem, size = 0x4, offset = 0x4, fixed_abs, tag = 'smem constant byte address 0x4 - core index']
  #allocation1 [shape = 'u32[144,128]{1,0:T(1,128)}', space=vmem, size = 0x12000, scoped, tag = 'internal scratch']
  %s0 = inlined_call_operand.vmem [shape: s32[24,1], index: 0, kind: input, shape index: {}]
  %s1 = inlined_call_operand.vmem [shape: s32[8,1], index: 1, kind: input, shape index: {}]
  %s2 = inlined_call_operand.vmem [shape: f32[32,3], index: 2, kind: input, shape index: {}]
  %s3 = inlined_call_operand.vmem [shape: f32[8,16], index: 3, kind: input, shape index: {}]
  %s4 = inlined_call_operand.vmem [shape: f32[17,3], index: 4, kind: input, shape index: {}]
  %s5 = inlined_call_operand.hbm [shape: f32[8,12], index: 5, kind: output, shape index: {}]
  %s6 = sld [smem:[#allocation0]]
  $region30: #{model_forward.1} parent=0
    _
  %s8 = ssub.s32 1, %s6
  %s9 = scalar_select 0, %s8, %s6
  $region1: #{model_forward.1} parent=0
    #allocation2 [shape = 'u8[4096]{0}', space=vmem, size = 0x1000, scoped, tag = 'output window, operand 0, single buffered']
    #allocation3 [shape = 's32[1]{0}', space=sflag, size = 0x4, scoped, tag = 'scoped memory for model_forward.1']
    %10 = vsyncpa [#allocation3], 0
    // Predicated region
    $region2: #{model_forward.1} parent=1 // pred_check
      _
    $region3: #{model_forward.1} parent=1 // pred_check_branch
      %12 = sbr.rel (0) target = $region5
    $region4: #{model_forward.1} parent=1 // pred_region
      _
    $region5: #{model_forward.1} parent=1 // pred_fallthru
      _
    // Predicated region
    $region6: #{model_forward.1} parent=1 // pred_check
      _
    $region7: #{model_forward.1} parent=1 // pred_check_branch
      %14 = sbr.rel (0) target = $region9
    $region8: #{model_forward.1} parent=1 // pred_region
      _
    $region9: #{model_forward.1} parent=1 // pred_fallthru
      _
    // Predicated region
    $region10: #{model_forward.1} parent=1 // pred_check
      _
    $region11: #{model_forward.1} parent=1 // pred_check_branch
      %16 = sbr.rel (0) target = $region13
    $region12: #{model_forward.1} parent=1 // pred_region
      _
    $region13: #{model_forward.1} parent=1 // pred_fallthru
      _
    // Predicated region
    $region14: #{model_forward.1} parent=1 // pred_check
      _
    $region15: #{model_forward.1} parent=1 // pred_check_branch
      %18 = sbr.rel (0) target = $region17
    $region16: #{model_forward.1} parent=1 // pred_region
      _
    $region17: #{model_forward.1} parent=1 // pred_fallthru
      _
    // Predicated region
    $region18: #{model_forward.1} parent=1 // pred_check
      _
    $region19: #{model_forward.1} parent=1 // pred_check_branch
      %20 = sbr.rel (0) target = $region21
    $region20: #{model_forward.1} parent=1 // pred_region
      _
    $region21: #{model_forward.1} parent=1 // pred_fallthru
      _
    %v21 = vld [vmem:[%s0] sm:$0xff]
    %v22 = vld [vmem:[%s0 + $0x8] sm:$0xff]
    %v23 = vld [vmem:[%s0 + $0x10] sm:$0xff]
    %v24 = vlaneseq
    %v25 = vand.u32 %v24, 127
    %26 = vset.pattern.permute.xlu0 0
    %27 = vperm.xlu0 %26, %v21
    %v28 = vpop.permute.xlu0 %27
    %29 = vset.pattern.permute.xlu0 0
    %30 = vperm.xlu0 %29, %v22
    %v31 = vpop.permute.xlu0 %30
    %32 = vset.pattern.permute.xlu0 0
    %33 = vperm.xlu0 %32, %v23
    %v34 = vpop.permute.xlu0 %33
    %vm35 = vcmp.eq.s32.totalorder %v25, %v28
    %vm36 = vcmp.eq.s32.totalorder %v25, %v31
    %vm37 = vcmp.eq.s32.totalorder %v25, %v34
    %v38 = vsel %vm35, 1, 0
    %v39 = vsel %vm36, 1, 0
    %v40 = vsel %vm37, 1, 0
    %v41 = vcvt.s32.f32 %v38
    %v42 = vcvt.s32.f32 %v39
    %v43 = vcvt.s32.f32 %v40
    %v44 = vld [vmem:[%s2] sm:$0xff]
    %v45 = vld [vmem:[%s2 + $0x8] sm:$0xff]
    %v46 = vld [vmem:[%s2 + $0x10] sm:$0xff]
    %v47 = vld [vmem:[%s2 + $0x18] sm:$0xff]
    %vm48 = vcmask 261120
    %v50 = vsel %vm48, %v41, 0
    %v53 = vsel %vm48, %v42, 0
    %v56 = vsel %vm48, %v43, 0
    %58 = vmatprep.subr.mxu0 0.0
    %59 = vmatpush1.msra.mxu0 0.0
    %60 = vmatprep.subr.mxu0 0.0
    %61 = vmatpush1.msra.mxu0 0.0
    %62 = vmatprep.subr.mxu0 0.0
    %63 = vmatpush1.msra.mxu0 0.0
    %64 = vmatprep.subr.mxu0 0.0
    %65 = vmatpush1.msra.mxu0 0.0
    %66 = vmatprep.subr.mxu0 0.0
    %67 = vmatpush1.msra.mxu0 0.0
    %68 = vmatprep.subr.mxu0 0.0
    %69 = vmatpush1.msra.mxu0 0.0
    %70 = vmatprep.subr.mxu0 0.0
    %71 = vmatpush1.msra.mxu0 0.0
    %72 = vmatprep.subr.mxu0 0.0
    %73 = vmatpush1.msra.mxu0 0.0
    %74 = vmatprep.subr.mxu0 0.0
    %75 = vmatpush1.msra.mxu0 0.0
    %76 = vmatprep.subr.mxu0 0.0
    %77 = vmatpush1.msra.mxu0 0.0
    %78 = vmatprep.subr.mxu0 0.0
    %79 = vmatpush1.msra.mxu0 0.0
    %80 = vmatprep.subr.mxu0 0.0
    %81 = vmatpush1.msra.mxu0 0.0
    %82 = vmatprep.subr.mxu0 0.0
    %83 = vmatpush1.msra.mxu0 %v47
    %84 = vmatprep.subr.mxu0 0.0
    %85 = vmatpush1.msra.mxu0 %v46
    %86 = vmatprep.subr.mxu0 0.0
    %87 = vmatpush1.msra.mxu0 %v45
    %88 = vmatprep.subr.mxu0 0.0
    %89 = vmatpush1.msra.mxu0 %v44
    %90 = vmatprep.subr.mxu0 0.0
    %91 = vmatpush2.msra.mxu0 0.0
    %92 = vmatprep.subr.mxu0 0.0
    %93 = vmatpush2.msra.mxu0 0.0
    %94 = vmatprep.subr.mxu0 0.0
    %95 = vmatpush2.msra.mxu0 0.0
    %96 = vmatprep.subr.mxu0 0.0
    %97 = vmatpush2.msra.mxu0 0.0
    %98 = vmatprep.subr.mxu0 0.0
    %99 = vmatpush2.msra.mxu0 0.0
    %100 = vmatprep.subr.mxu0 0.0
    %101 = vmatpush2.msra.mxu0 0.0
    %102 = vmatprep.subr.mxu0 0.0
    %103 = vmatpush2.msra.mxu0 0.0
    %104 = vmatprep.subr.mxu0 0.0
    %105 = vmatpush2.msra.mxu0 0.0
    %106 = vmatprep.subr.mxu0 0.0
    %107 = vmatpush2.msra.mxu0 0.0
    %108 = vmatprep.subr.mxu0 0.0
    %109 = vmatpush2.msra.mxu0 0.0
    %110 = vmatprep.subr.mxu0 0.0
    %111 = vmatpush2.msra.mxu0 0.0
    %112 = vmatprep.subr.mxu0 0.0
    %113 = vmatpush2.msra.mxu0 0.0
    %114 = vmatprep.subr.mxu0 0.0
    %115 = vmatpush2.msra.mxu0 0.0
    %116 = vmatprep.subr.mxu0 0.0
    %117 = vmatpush2.msra.mxu0 0.0
    %118 = vmatprep.subr.mxu0 0.0
    %119 = vmatpush2.msra.mxu0 0.0
    %120 = vmatprep.subr.mxu0 0.0
    %121 = vmatpush2.msra.mxu0 0.0
    %122 = vmatprep.mubr.f32.mxu0 0.0
    %123 = vmatmul.mubr.f32.gmra.mxu0 %v50
    %v124 = vpop.f32.mrf.mxu0
    %v125 = vadd.f32 0.0, %v124
    %v126 = vpop.f32.mrf.mxu0
    %127 = vmatprep.mubr.f32.mxu0 0.0
    %128 = vmatmul.mubr.f32.gmra.mxu0 %v53
    %v129 = vpop.f32.mrf.mxu0
    %v130 = vadd.f32 0.0, %v129
    %v131 = vpop.f32.mrf.mxu0
    %132 = vmatprep.mubr.f32.mxu0 0.0
    %133 = vmatmul.mubr.f32.gmra.mxu0 %v56
    %v134 = vpop.f32.mrf.mxu0
    %v135 = vadd.f32 0.0, %v134
    %v136 = vpop.f32.mrf.mxu0
    %137 = vdwg.mxu0
    %v138 = vld [vmem:[%s1] sm:$0xff]
    %139 = vset.pattern.permute.xlu0 0
    %140 = vperm.xlu0 %139, %v138
    %v141 = vpop.permute.xlu0 %140
    %vm142 = vcmp.ge.s32.totalorder %v25, %v141
    %v143 = vsel %vm142, 1, 0
    %vm144 = vcmask 195584
    %v145 = vsel %vm144, %v143, 0
    %v146 = vrot.slane %v145, 4
    %v147 = vadd.s32 %v145, %v146
    %v148 = vrot.slane %v147, 2
    %v149 = vadd.s32 %v147, %v148
    %v150 = vrot.slane %v149, 1
    %v151 = vadd.s32 %v149, %v150
    %v152 = vsub.s32 %v151, 1
    %v153 = vlaneseq
    %v154 = vshrl.u32 %v153, 7
    %vm155 = vcmp.eq.s32.totalorder %v154, %v152
    %v156 = vsel %vm155, 1, 0
    %v157 = vcvt.s32.f32 %v156
    %v158 = vsel %vm144, %v157, 0.0
    %159 = vadd.xlane.f32.xlu0 %v158
    %v160 = vpop.xlane.xlu0 %159
    %v161 = vmax.f32 %v160, 1.0
    %v162 = vrcp.pop %v161
    %v163 = vmul.f32 1.0, %v162
    %v165 = vsel %vm144, %v157, 0
    %167 = vmatprep.subr.mxu0 0.0
    %168 = vmatpush1.msra.mxu0 0.0
    %169 = vmatprep.subr.mxu0 0.0
    %170 = vmatpush1.msra.mxu0 0.0
    %171 = vmatprep.subr.mxu0 0.0
    %172 = vmatpush1.msra.mxu0 0.0
    %173 = vmatprep.subr.mxu0 0.0
    %174 = vmatpush1.msra.mxu0 0.0
    %175 = vmatprep.subr.mxu0 0.0
    %176 = vmatpush1.msra.mxu0 0.0
    %177 = vmatprep.subr.mxu0 0.0
    %178 = vmatpush1.msra.mxu0 0.0
    %179 = vmatprep.subr.mxu0 0.0
    %180 = vmatpush1.msra.mxu0 0.0
    %181 = vmatprep.subr.mxu0 0.0
    %182 = vmatpush1.msra.mxu0 0.0
    %183 = vmatprep.subr.mxu0 0.0
    %184 = vmatpush1.msra.mxu0 0.0
    %185 = vmatprep.subr.mxu0 0.0
    %186 = vmatpush1.msra.mxu0 0.0
    %187 = vmatprep.subr.mxu0 0.0
    %188 = vmatpush1.msra.mxu0 0.0
    %189 = vmatprep.subr.mxu0 0.0
    %190 = vmatpush1.msra.mxu0 0.0
    %191 = vmatprep.subr.mxu0 0.0
    %192 = vmatpush1.msra.mxu0 0.0
    %193 = vmatprep.subr.mxu0 0.0
    %194 = vmatpush1.msra.mxu0 %v135
    %195 = vmatprep.subr.mxu0 0.0
    %196 = vmatpush1.msra.mxu0 %v130
    %197 = vmatprep.subr.mxu0 0.0
    %198 = vmatpush1.msra.mxu0 %v125
    %199 = vmatprep.subr.mxu0 0.0
    %200 = vmatpush2.msra.mxu0 0.0
    %201 = vmatprep.subr.mxu0 0.0
    %202 = vmatpush2.msra.mxu0 0.0
    %203 = vmatprep.subr.mxu0 0.0
    %204 = vmatpush2.msra.mxu0 0.0
    %205 = vmatprep.subr.mxu0 0.0
    %206 = vmatpush2.msra.mxu0 0.0
    %207 = vmatprep.subr.mxu0 0.0
    %208 = vmatpush2.msra.mxu0 0.0
    %209 = vmatprep.subr.mxu0 0.0
    %210 = vmatpush2.msra.mxu0 0.0
    %211 = vmatprep.subr.mxu0 0.0
    %212 = vmatpush2.msra.mxu0 0.0
    %213 = vmatprep.subr.mxu0 0.0
    %214 = vmatpush2.msra.mxu0 0.0
    %215 = vmatprep.subr.mxu0 0.0
    %216 = vmatpush2.msra.mxu0 0.0
    %217 = vmatprep.subr.mxu0 0.0
    %218 = vmatpush2.msra.mxu0 0.0
    %219 = vmatprep.subr.mxu0 0.0
    %220 = vmatpush2.msra.mxu0 0.0
    %221 = vmatprep.subr.mxu0 0.0
    %222 = vmatpush2.msra.mxu0 0.0
    %223 = vmatprep.subr.mxu0 0.0
    %224 = vmatpush2.msra.mxu0 0.0
    %225 = vmatprep.subr.mxu0 0.0
    %226 = vmatpush2.msra.mxu0 0.0
    %227 = vmatprep.subr.mxu0 0.0
    %228 = vmatpush2.msra.mxu0 0.0
    %229 = vmatprep.subr.mxu0 0.0
    %230 = vmatpush2.msra.mxu0 0.0
    %231 = vmatprep.mubr.f32.mxu0 0.0
    %232 = vmatmul.mubr.f32.gmra.mxu0 %v165
    %v233 = vpop.f32.mrf.mxu0
    %v234 = vadd.f32 0.0, %v233
    %v235 = vpop.f32.mrf.mxu0
    %236 = vdwg.mxu0
    %v237 = vmul.f32 %v234, %v163
    %v238 = vld [vmem:[%s4] sm:$0xff]
    %v239 = vld [vmem:[%s4 + $0x8] sm:$0xff]
    %v240 = vld [vmem:[%s4 + $0x10] sm:$0x1]
    %v241 = vld [vmem:[%s3] sm:$0xff]
    %v242 = vlaneseq
    %v243 = vshrl.u32 %v242, 7
    %v244 = vsub.s32 0, %v243
    %v245 = vrot.slane %v240, %v244
    %vm246 = vcmask 130048
    %v248 = vsel %vm246, %v241, 0
    %250 = vmatprep.subr.mxu0 0.0
    %251 = vmatpush1.msra.mxu0 0.0
    %252 = vmatprep.subr.mxu0 0.0
    %253 = vmatpush1.msra.mxu0 0.0
    %254 = vmatprep.subr.mxu0 0.0
    %255 = vmatpush1.msra.mxu0 0.0
    %256 = vmatprep.subr.mxu0 0.0
    %257 = vmatpush1.msra.mxu0 0.0
    %258 = vmatprep.subr.mxu0 0.0
    %259 = vmatpush1.msra.mxu0 0.0
    %260 = vmatprep.subr.mxu0 0.0
    %261 = vmatpush1.msra.mxu0 0.0
    %262 = vmatprep.subr.mxu0 0.0
    %263 = vmatpush1.msra.mxu0 0.0
    %264 = vmatprep.subr.mxu0 0.0
    %265 = vmatpush1.msra.mxu0 0.0
    %266 = vmatprep.subr.mxu0 0.0
    %267 = vmatpush1.msra.mxu0 0.0
    %268 = vmatprep.subr.mxu0 0.0
    %269 = vmatpush1.msra.mxu0 0.0
    %270 = vmatprep.subr.mxu0 0.0
    %271 = vmatpush1.msra.mxu0 0.0
    %272 = vmatprep.subr.mxu0 0.0
    %273 = vmatpush1.msra.mxu0 0.0
    %274 = vmatprep.subr.mxu0 0.0
    %275 = vmatpush1.msra.mxu0 0.0
    %276 = vmatprep.subr.mxu0 0.0
    %277 = vmatpush1.msra.mxu0 0.0
    %278 = vmatprep.subr.mxu0 0.0
    %279 = vmatpush1.msra.mxu0 %v239
    %280 = vmatprep.subr.mxu0 0.0
    %281 = vmatpush1.msra.mxu0 %v238
    %282 = vmatprep.subr.mxu0 0.0
    %283 = vmatpush2.msra.mxu0 0.0
    %284 = vmatprep.subr.mxu0 0.0
    %285 = vmatpush2.msra.mxu0 0.0
    %286 = vmatprep.subr.mxu0 0.0
    %287 = vmatpush2.msra.mxu0 0.0
    %288 = vmatprep.subr.mxu0 0.0
    %289 = vmatpush2.msra.mxu0 0.0
    %290 = vmatprep.subr.mxu0 0.0
    %291 = vmatpush2.msra.mxu0 0.0
    %292 = vmatprep.subr.mxu0 0.0
    %293 = vmatpush2.msra.mxu0 0.0
    %294 = vmatprep.subr.mxu0 0.0
    %295 = vmatpush2.msra.mxu0 0.0
    %296 = vmatprep.subr.mxu0 0.0
    %297 = vmatpush2.msra.mxu0 0.0
    %298 = vmatprep.subr.mxu0 0.0
    %299 = vmatpush2.msra.mxu0 0.0
    %300 = vmatprep.subr.mxu0 0.0
    %301 = vmatpush2.msra.mxu0 0.0
    %302 = vmatprep.subr.mxu0 0.0
    %303 = vmatpush2.msra.mxu0 0.0
    %304 = vmatprep.subr.mxu0 0.0
    %305 = vmatpush2.msra.mxu0 0.0
    %306 = vmatprep.subr.mxu0 0.0
    %307 = vmatpush2.msra.mxu0 0.0
    %308 = vmatprep.subr.mxu0 0.0
    %309 = vmatpush2.msra.mxu0 0.0
    %310 = vmatprep.subr.mxu0 0.0
    %311 = vmatpush2.msra.mxu0 0.0
    %312 = vmatprep.subr.mxu0 0.0
    %313 = vmatpush2.msra.mxu0 0.0
    %314 = vmatprep.mubr.f32.mxu0 0.0
    %315 = vmatmul.mubr.f32.gmra.mxu0 %v248
    %v316 = vpop.f32.mrf.mxu0
    %v317 = vadd.f32 %v245, %v316
    %v318 = vpop.f32.mrf.mxu0
    %319 = vdwg.mxu0
    %321 = vrot.lane.b32.xlu0 %v237, 3
    %v322 = vpop.permute.xlu0 %321
    %324 = vrot.lane.b32.xlu0 %v237, 6
    %v325 = vpop.permute.xlu0 %324
    %328 = vrot.lane.b32.xlu0 %v317, 9
    %v329 = vpop.permute.xlu0 %328
    %vm331 = vcmask 23552
    %v332 = vsel %vm331, %v237, %v322
    %vm333 = vcmask 48128
    %v334 = vsel %vm333, %v332, %v325
    %vm335 = vcmask 72704
    %v336 = vsel %vm335, %v334, %v329
    %vm337 = vcmask 97280
    %338 = vst.msk [vmem:[#allocation2] sm:$0xff] %vm337, %v336
    // Predicated region
    $region22: #{model_forward.1} parent=1 // pred_check
      _
    $region23: #{model_forward.1} parent=1 // pred_check_branch
      %340 = sbr.rel (0) target = $region25
    $region24: #{model_forward.1} parent=1 // pred_region
      %s342 = ssub.s32 128, 128
      %343 = vsyncadd [#allocation3], %s342
      %s345 = sshll.u32 [#allocation2], 4
      %s346 = int_to_ptr.vmem [resolvable:$true] %s345
      %348 = dma.vmem_to_hbm [thread:$0]  %s346, 128, %s5, [#allocation3]
    $region25: #{model_forward.1} parent=1 // pred_fallthru
      _
    // Predicated region
    $region26: #{model_forward.1} parent=1 // pred_check
      _
    $region27: #{model_forward.1} parent=1 // pred_check_branch
      %350 = sbr.rel (0) target = $region29
    $region28: #{model_forward.1} parent=1 // pred_region
      %351 = dma.done [#allocation3], 128
    $region29: #{model_forward.1} parent=1 // pred_fallthru
      _
    %352 = vsyncpa [#allocation3], 1

</llo_original>
